<compile_context>
chip_gen: v5e
topology: v5e:2x2
jax: 0.10.0
libtpu: 0.0.40
codegen_flags: <defaults>
</compile_context>

<pallas_src>
import jax
import jax.numpy as jnp
from jax.experimental import pallas as pl
from jax.experimental.pallas import tpu as pltpu

_MAX_TILE_ROWS = 1024        # sublane-axis tile (multiple of 8); 1024x1024 f32 = 4 MiB
_MAX_TILE_COLS = 1024        # lane-axis tile (multiple of 128) -> unmasked, lane-dense vst
_MIN_GRID_STEPS = 4          # keep >= 4 grid steps so both v7x TCs get work
_SMALL_N = 64 * 1024         # below ~one tile: plain jnp (no launch / layout overhead)
_VMEM_LIMIT = 40 << 20       # 2 x (in + out) 4 MiB blocks = 16 MiB; headroom below
                             # v7x's 64 MiB physical VMEM, explicit so v5e doesn't OOM


def _round_up(x: int, m: int) -> int:
    return ((x + m - 1) // m) * m


def _regression_kernel(w_ref, b_ref, x_ref, o_ref):
    # w_ref / b_ref are (1,) f32 scalars in SMEM. Fold the constants once per
    # grid step; per-tile work is one broadcast-mul + one broadcast-add (VPU).
    w_eff = w_ref[0] + jnp.float32(0.0101)
    b_eff = b_ref[0] + jnp.float32(0.0205)
    o_ref[...] = w_eff * x_ref[...] + b_eff


def regression_forward(x: jax.Array, weights: jax.Array, bias: jax.Array) -> jax.Array:
    """Elementwise affine map y = (w + 0.0101) * x + b + 0.0205 for any rank."""
    assert x.dtype == jnp.float32, "regressionModel operates in float32"
    assert weights.shape == (1,) and bias.shape == (1,)

    orig_shape = x.shape
    n = 1
    for d in orig_shape:
        n *= int(d)
    if n == 0:
        return jnp.zeros(orig_shape, dtype=jnp.float32)

    # --- Small-input fast path: one fused XLA elementwise op beats a kernel
    # launch plus layout plumbing for sub-tile work. ---------------------------
    if n < _SMALL_N:
        return (weights[0] + jnp.float32(0.0101)) * x + (bias[0] + jnp.float32(0.0205))

    # --- Choose a lane-dense 2-D layout without extra HBM traffic. ------------
    # Prefer the widest cols in {1024, 512, 256, 128} that divides n: the flat
    # reshape is then a free, contiguous re-view (no pad, no slice).
    cols = None
    for c in (1024, 512, 256, 128):
        if n % c == 0:
            cols = c
            break

    if cols is not None:
        rows = n // cols
        x2d = x.reshape(rows, cols)
        pad = 0
    else:
        # Rare fallback (n not a multiple of 128): pad the flat tail only.
        cols = _MAX_TILE_COLS
        padded_n = _round_up(n, cols)
        pad = padded_n - n
        rows = padded_n // cols
        x2d = jnp.pad(x.reshape(-1), (0, pad)).reshape(rows, cols)

    # Rows are NOT padded to the tile: grid = cdiv(rows, tile_rows) and Pallas
    # masks the partial last row-block of this elementwise output.
    tile_rows = min(_MAX_TILE_ROWS,
                    max(8, _round_up(pl.cdiv(rows, _MIN_GRID_STEPS), 8)))
    grid = (pl.cdiv(rows, tile_rows),)

    y2d = pl.pallas_call(
        _regression_kernel,
        out_shape=jax.ShapeDtypeStruct((rows, cols), jnp.float32),
        grid=grid,
        in_specs=[
            pl.BlockSpec(memory_space=pltpu.SMEM),             # weights (scalar)
            pl.BlockSpec(memory_space=pltpu.SMEM),             # bias (scalar)
            pl.BlockSpec((tile_rows, cols), lambda i: (i, 0)),
        ],
        out_specs=pl.BlockSpec((tile_rows, cols), lambda i: (i, 0)),
        compiler_params=pltpu.CompilerParams(
            dimension_semantics=("parallel",),                 # shard across v7x TCs
            vmem_limit_bytes=_VMEM_LIMIT,
        ),
        cost_estimate=pl.CostEstimate(
            flops=2 * n,
            transcendentals=0,
            bytes_accessed=8 * n,
        ),
    )(weights, bias, x2d)

    if pad:
        return y2d.reshape(-1)[:n].reshape(orig_shape)
    return y2d.reshape(orig_shape)


if __name__ == "__main__":
    key = jax.random.PRNGKey(0)
    k_w, k_b, k1, k2, k3, k4 = jax.random.split(key, 6)

    # Deterministic "randn"-style parameter init (matches shapes in __init__).
    weights = jax.random.normal(k_w, (1,), dtype=jnp.float32)
    bias = jax.random.normal(k_b, (1,), dtype=jnp.float32)

    # Test cases cover: the classic (N, 1) regression shape and a small odd N-D
    # tensor (jnp fast path), an aligned medium tensor (copy-free kernel path),
    # and an unaligned medium tensor (padded fallback kernel path).
    test_cases = [((50, 1), k1), ((3, 5, 7), k2), ((256, 512), k3), ((300, 257), k4)]
    for shp, kk in test_cases:
        x = jax.random.normal(kk, shp, dtype=jnp.float32)
        y = jax.block_until_ready(regression_forward(x, weights, bias))

        # Reference check in plain JAX.
        y_ref = (weights[0] + 0.0101) * x + bias[0] + 0.0205
        assert y.shape == x.shape, f"shape mismatch for {shp}"
        assert jnp.allclose(y, y_ref, atol=1e-6, rtol=1e-6), f"mismatch for {shp}"

    print("KERNEL_OK")
</pallas_src>

<mosaic_0001>
module attributes {stable_mosaic.version = 11 : i64} {
  func.func @_regression_kernel(%arg0: i32, %arg1: memref<1xf32, #tpu.memory_space<smem>>, %arg2: memref<1xf32, #tpu.memory_space<smem>>, %arg3: memref<32x1024xf32, #tpu.memory_space<vmem>>, %arg4: memref<32x1024xf32, #tpu.memory_space<vmem>>) attributes {dimension_semantics = [#tpu.dimension_semantics<parallel>], iteration_bounds = array<i64: 4>, scalar_prefetch = 0 : i64, scratch_operands = 0 : i64, tpu.core_type = #tpu.core_type<tc>, window_params = [{transform_indices = @transform_0, window_bounds = array<i64: 1>}, {transform_indices = @transform_1, window_bounds = array<i64: 1>}, {transform_indices = @transform_2, window_bounds = array<i64: 32, 1024>}, {transform_indices = @transform_3, window_bounds = array<i64: 32, 1024>}]} {
    %c0 = arith.constant 0 : index
    %0 = memref.load %arg1[%c0] : memref<1xf32, #tpu.memory_space<smem>>
    %cst = arith.constant 1.010000e-02 : f32
    %1 = arith.addf %0, %cst : f32
    %c0_0 = arith.constant 0 : index
    %2 = memref.load %arg2[%c0_0] : memref<1xf32, #tpu.memory_space<smem>>
    %cst_1 = arith.constant 2.050000e-02 : f32
    %3 = arith.addf %2, %cst_1 : f32
    %c0_2 = arith.constant 0 : index
    %c0_3 = arith.constant 0 : index
    %4 = vector.load %arg3[%c0_2, %c0_3] : memref<32x1024xf32, #tpu.memory_space<vmem>>, vector<32x1024xf32>
    %5 = vector.broadcast %1 : f32 to vector<32x1024xf32>
    %6 = arith.mulf %5, %4 : vector<32x1024xf32>
    %7 = vector.broadcast %3 : f32 to vector<32x1024xf32>
    %8 = arith.addf %6, %7 : vector<32x1024xf32>
    %c0_4 = arith.constant 0 : index
    %c0_5 = arith.constant 0 : index
    %9 = vector.load %arg4[%c0_4, %c0_5] : memref<32x1024xf32, #tpu.memory_space<vmem>>, vector<32x1024xf32>
    tpu.vector_store %arg4[%c0_4, %c0_5], %8 {strides = array<i32>} : memref<32x1024xf32, #tpu.memory_space<vmem>>, vector<32x1024xf32>,
    return
  }
  func.func @transform_0(%arg0: i32) -> i32 {
    %c0_i32 = arith.constant 0 : i32
    %c0_i32_0 = arith.constant 0 : i32
    return %c0_i32 : i32
  }
  func.func @transform_1(%arg0: i32) -> i32 {
    %c0_i32 = arith.constant 0 : i32
    %c0_i32_0 = arith.constant 0 : i32
    return %c0_i32 : i32
  }
  func.func @transform_2(%arg0: i32) -> (i32, i32) {
    %c0_i32 = arith.constant 0 : i32
    %c0_i32_0 = arith.constant 0 : i32
    return %arg0, %c0_i32 : i32, i32
  }
  func.func @transform_3(%arg0: i32) -> (i32, i32) {
    %c0_i32 = arith.constant 0 : i32
    %c0_i32_0 = arith.constant 0 : i32
    return %arg0, %c0_i32 : i32, i32
  }
}

</mosaic_0001>

<llo_original>
// kernel: tpu_custom_call.1
$region0: #{tpu_custom_call.1}
  #allocation0 [shape = 'u32[]', space=smem, size = 0x4, offset = 0x4, fixed_abs, tag = 'smem constant byte address 0x4 - core index']
  #allocation1 [shape = 'u32[72,128]{1,0:T(1,128)}', space=vmem, size = 0x9000, scoped, tag = 'internal scratch']
  #allocation2 [shape = 'f32[1]{0:T(128)S(6)}', space=smem, size = 0x200, scoped, tag = 'scoped memory for tpu_custom_call.1']
  #allocation3 [shape = 'f32[1]{0:T(128)S(6)}', space=smem, size = 0x200, scoped, tag = 'scoped memory for tpu_custom_call.1']
  %s0 = inlined_call_operand.<no memory space> [shape: f32[1], index: 0, kind: input, shape index: {}]
  %s1 = inlined_call_operand.<no memory space> [shape: f32[1], index: 1, kind: input, shape index: {}]
  %s2 = inlined_call_operand.hbm [shape: f32[128,1024], index: 2, kind: input, shape index: {}]
  %s3 = inlined_call_operand.hbm [shape: f32[128,1024], index: 3, kind: output, shape index: {}]
  %s4 = sld [smem:[#allocation0]]
  $region49: #{tpu_custom_call.1} parent=0
    _
  %s6 = ssub.s32 1, %s4
  %s7 = scalar_select 0, %s6, %s4
  %8 = sst [smem:[#allocation2]] %s0
  %9 = sst [smem:[#allocation3]] %s1
  $region1: #{tpu_custom_call.1} parent=0
    #allocation4 [shape = 'u8[262144]{0}', space=vmem, size = 0x40000, scoped, tag = 'input window, operand 2']
    #allocation5 [shape = 's32[2]{0}', space=sflag, size = 0x8, scoped, tag = 'scoped memory for tpu_custom_call.1']
    #allocation6 [shape = 's32[2]{0}', space=sflag, size = 0x8, scoped, tag = 'scoped memory for tpu_custom_call.1']
    #allocation7 [shape = 'u8[262144]{0}', space=vmem, size = 0x40000, scoped, tag = 'output window, operand 0']
    %10 = vsyncpa [#allocation5], 0
    %s11 = scalar_lea.sflag [#allocation5], 1
    %12 = vsyncpa %s11, 0
    %13 = vsyncpa [#allocation6], 0
    %s14 = scalar_lea.sflag [#allocation6], 1
    %15 = vsyncpa %s14, 0
    loop: start=0, step=1, limit=6
    $region2: #{tpu_custom_call.1} parent=1 // loop_pre_header
      _
    $region3: #{tpu_custom_call.1} parent=1 // loop_header
      %s17 = sphi 0, %s21
      %p18 = scmp.ge.s32.totalorder %s17, 6
      %s25 = sphi 0, %s25
      %s27 = sphi 0, %s25
      %s28 = sphi 0, %s27
      %s42 = sphi 0, %s28
      %s46 = sphi 0, %s46
      %s48 = sphi 0, %s46
      %s49 = sphi 0, %s48
      %s63 = sphi 0, %s49
      %s69 = sphi 0, %s71
      %s72 = sphi 0, %s69
      %s73 = sphi 0, %s72
      %s89 = sphi 0, %s73
      %s95 = sphi 0, %s97
      %s98 = sphi 0, %s95
      %s99 = sphi 0, %s98
      %s115 = sphi 0, %s99
    $region4: #{tpu_custom_call.1} parent=1 // loop_header_branch
      %20 = sbr.rel (%p18) target = $region8
    $region5: #{tpu_custom_call.1} parent=1 // loop_body
      %s22 = ssub.s32 %s17, 1
      %s23 = ssub.s32 %s17, 2
      %s24 = sadd.s32 %s17, 1
      %s26 = sadd.s32 %s25, 1
      %p29 = scmp.eq.s32.totalorder %s17, 3
      %p30 = scmp.ne.s32.totalorder %s25, %s27
      %p31 = scmp.eq.s32.totalorder %s17, 0
      %p32 = por %p30, %p31
      %p33 = scmp.ne.s32.totalorder %s25, %s27
      %p34 = scmp.eq.s32.totalorder %s22, 3
      %p35 = por %p33, %p34
      %p36 = scmp.ne.s32.totalorder %s27, %s28
      %p37 = scmp.eq.s32.totalorder %s22, 0
      %p38 = por %p36, %p37
      %p39 = scmp.ne.s32.totalorder %s27, %s28
      %p40 = scmp.eq.s32.totalorder %s23, 3
      %p41 = por %p39, %p40
      %p43 = scmp.ne.s32.totalorder %s28, %s42
      %p44 = scmp.eq.s32.totalorder %s23, 0
      %p45 = por %p43, %p44
      %s47 = sadd.s32 %s46, 1
      %p50 = scmp.eq.s32.totalorder %s17, 3
      %p51 = scmp.ne.s32.totalorder %s46, %s48
      %p52 = scmp.eq.s32.totalorder %s17, 0
      %p53 = por %p51, %p52
      %p54 = scmp.ne.s32.totalorder %s46, %s48
      %p55 = scmp.eq.s32.totalorder %s22, 3
      %p56 = por %p54, %p55
      %p57 = scmp.ne.s32.totalorder %s48, %s49
      %p58 = scmp.eq.s32.totalorder %s22, 0
      %p59 = por %p57, %p58
      %p60 = scmp.ne.s32.totalorder %s48, %s49
      %p61 = scmp.eq.s32.totalorder %s23, 3
      %p62 = por %p60, %p61
      %p64 = scmp.ne.s32.totalorder %s49, %s63
      %p65 = scmp.eq.s32.totalorder %s23, 0
      %p66 = por %p64, %p65
      %s67 = ssub.s32 %s17, %s24
      %p68 = scmp.eq.s32.totalorder %s67, 0
      %s70 = sadd.s32 %s69, 1
      %s71 = scalar_select %p68, %s69, %s70
      %p74 = pneg %p68
      %p75 = scmp.eq.s32.totalorder %s17, 3
      %p76 = por %p74, %p75
      %p77 = scmp.ne.s32.totalorder %s69, %s72
      %p78 = scmp.eq.s32.totalorder %s17, 0
      %p79 = por %p77, %p78
      %p80 = scmp.ne.s32.totalorder %s69, %s72
      %p81 = scmp.eq.s32.totalorder %s22, 3
      %p82 = por %p80, %p81
      %p83 = scmp.ne.s32.totalorder %s72, %s73
      %p84 = scmp.eq.s32.totalorder %s22, 0
      %p85 = por %p83, %p84
      %p86 = scmp.ne.s32.totalorder %s72, %s73
      %p87 = scmp.eq.s32.totalorder %s23, 3
      %p88 = por %p86, %p87
      %p90 = scmp.ne.s32.totalorder %s73, %s89
      %p91 = scmp.eq.s32.totalorder %s23, 0
      %p92 = por %p90, %p91
      %s93 = ssub.s32 %s17, %s24
      %p94 = scmp.eq.s32.totalorder %s93, 0
      %s96 = sadd.s32 %s95, 1
      %s97 = scalar_select %p94, %s95, %s96
      %p100 = pneg %p94
      %p101 = scmp.eq.s32.totalorder %s17, 3
      %p102 = por %p100, %p101
      %p103 = scmp.ne.s32.totalorder %s95, %s98
      %p104 = scmp.eq.s32.totalorder %s17, 0
      %p105 = por %p103, %p104
      %p106 = scmp.ne.s32.totalorder %s95, %s98
      %p107 = scmp.eq.s32.totalorder %s22, 3
      %p108 = por %p106, %p107
      %p109 = scmp.ne.s32.totalorder %s98, %s99
      %p110 = scmp.eq.s32.totalorder %s22, 0
      %p111 = por %p109, %p110
      %p112 = scmp.ne.s32.totalorder %s98, %s99
      %p113 = scmp.eq.s32.totalorder %s23, 3
      %p114 = por %p112, %p113
      %p116 = scmp.ne.s32.totalorder %s99, %s115
      %p117 = scmp.eq.s32.totalorder %s23, 0
      %p118 = por %p116, %p117
      %p119 = scmp.le.s32.totalorder 1, %s17
      %p120 = scmp.lt.s32.totalorder %s17, 5
      %p121 = pnand %p119, %p120
      %p122 = pneg %p121
      // Predicated region
      $region9: #{tpu_custom_call.1} parent=5 // pred_check
        _
      $region10: #{tpu_custom_call.1} parent=5 // pred_check_branch
        %124 = sbr.rel (%p121) target = $region12
      $region11: #{tpu_custom_call.1} parent=5 // pred_region
        %s125 = ssub.s32 %s17, 1
        // Predicated region
        $region13: #{tpu_custom_call.1} parent=11 // pred_check
          %p126 = pneg %p38
        $region14: #{tpu_custom_call.1} parent=11 // pred_check_branch
          %128 = sbr.rel (%p126) target = $region16
        $region15: #{tpu_custom_call.1} parent=11 // pred_region
          _
        $region16: #{tpu_custom_call.1} parent=11 // pred_fallthru
          _
        // Predicated region
        $region17: #{tpu_custom_call.1} parent=11 // pred_check
          %p129 = pneg %p59
        $region18: #{tpu_custom_call.1} parent=11 // pred_check_branch
          %131 = sbr.rel (%p129) target = $region20
        $region19: #{tpu_custom_call.1} parent=11 // pred_region
          _
        $region20: #{tpu_custom_call.1} parent=11 // pred_fallthru
          _
      $region12: #{tpu_custom_call.1} parent=5 // pred_fallthru
        _
      %p132 = scmp.lt.s32.totalorder %s17, 4
      // Predicated region
      $region21: #{tpu_custom_call.1} parent=5 // pred_check
        %p133 = pneg %p132
      $region22: #{tpu_custom_call.1} parent=5 // pred_check_branch
        %135 = sbr.rel (%p133) target = $region24
      $region23: #{tpu_custom_call.1} parent=5 // pred_region
        // Predicated region
        $region25: #{tpu_custom_call.1} parent=23 // pred_check
          %p136 = pneg %p79
        $region26: #{tpu_custom_call.1} parent=23 // pred_check_branch
          %138 = sbr.rel (%p136) target = $region28
        $region27: #{tpu_custom_call.1} parent=23 // pred_region
          %s139 = sand.u32 %s69, 1
          %s140 = scalar_lea.sflag [#allocation5], %s139
          %s141 = sand.u32 %s69, 1
          %s142 = smul.addr %s141, 256
          %s143 = scalar_lea.vmem [#allocation4], %s142
          %s144 = smul.u32 4, %s17
          %146 = vsyncadd %s140, 0
          %s147 = smul.addr %s144, 8
          %s148 = smul.addr %s147, 8
          %s149 = scalar_lea.hbm %s2, %s148
          %s150 = sshll.u32 %s149, 4
          %s151 = int_to_ptr.hbm [resolvable:$true] %s150
          %s152 = sshll.u32 %s143, 4
          %s153 = int_to_ptr.vmem [resolvable:$true] %s152
          %158 = dma.hbm_to_vmem [thread:$0]  %s151, 4096, %s153, %s140, 1024, 1024, 64
        $region28: #{tpu_custom_call.1} parent=23 // pred_fallthru
          _
      $region24: #{tpu_custom_call.1} parent=5 // pred_fallthru
        _
      %p159 = scmp.le.s32.totalorder 1, %s17
      %p160 = scmp.lt.s32.totalorder %s17, 5
      %p161 = pnand %p159, %p160
      %p162 = pneg %p161
      // Predicated region
      $region29: #{tpu_custom_call.1} parent=5 // pred_check
        _
      $region30: #{tpu_custom_call.1} parent=5 // pred_check_branch
        %164 = sbr.rel (%p161) target = $region32
      $region31: #{tpu_custom_call.1} parent=5 // pred_region
        %s165 = ssub.s32 %s17, 1
        %s166 = sand.u32 %s72, 1
        %s167 = scalar_lea.sflag [#allocation5], %s166
        %s168 = sand.u32 %s72, 1
        %s169 = smul.addr %s168, 256
        %s170 = scalar_lea.vmem [#allocation4], %s169
        // Predicated region
        $region33: #{tpu_custom_call.1} parent=31 // pred_check
          %p171 = pneg %p85
        $region34: #{tpu_custom_call.1} parent=31 // pred_check_branch
          %173 = sbr.rel (%p171) target = $region36
        $region35: #{tpu_custom_call.1} parent=31 // pred_region
          %175 = dma.done %s167, 4096
        $region36: #{tpu_custom_call.1} parent=31 // pred_fallthru
          _
        %p176 = pneg %p38
        %p177 = pneg %p35
        %p178 = pneg %p59
        %p179 = pneg %p56
        %s180 = sand.u32 %s72, 1
        %s181 = scalar_lea.sflag [#allocation5], %s180
        %s182 = sand.u32 %s72, 1
        %s183 = smul.addr %s182, 256
        %s184 = scalar_lea.vmem [#allocation4], %s183
        %p185 = pneg %p85
        %p186 = pneg %p82
        %p187 = pneg %p111
        %p188 = pneg %p108
        %s189 = sand.u32 %s98, 1
        %s190 = scalar_lea.sflag [#allocation6], %s189
        %s191 = sand.u32 %s98, 1
        %s192 = smul.addr %s191, 256
        %s193 = scalar_lea.vmem [#allocation7], %s192
        %s194 = smul.u32 4, %s22
        %s195 = smul.u32 4, %s22
        %s196 = sld [smem:[#allocation2]]
        %s197 = sadd.f32 %s196, 0.0101
        %s198 = sld [smem:[#allocation3]]
        %s199 = sadd.f32 %s198, 0.0205
        %v200 = vld [vmem:[%s170] sm:$0xff]
        %v201 = vld [vmem:[%s170 + $0x8] sm:$0xff]
        %v202 = vld [vmem:[%s170 + $0x10] sm:$0xff]
        %v203 = vld [vmem:[%s170 + $0x18] sm:$0xff]
        %v204 = vld [vmem:[%s170 + $0x20] sm:$0xff]
        %v205 = vld [vmem:[%s170 + $0x28] sm:$0xff]
        %v206 = vld [vmem:[%s170 + $0x30] sm:$0xff]
        %v207 = vld [vmem:[%s170 + $0x38] sm:$0xff]
        %v208 = vld [vmem:[%s170 + $0x40] sm:$0xff]
        %v209 = vld [vmem:[%s170 + $0x48] sm:$0xff]
        %v210 = vld [vmem:[%s170 + $0x50] sm:$0xff]
        %v211 = vld [vmem:[%s170 + $0x58] sm:$0xff]
        %v212 = vld [vmem:[%s170 + $0x60] sm:$0xff]
        %v213 = vld [vmem:[%s170 + $0x68] sm:$0xff]
        %v214 = vld [vmem:[%s170 + $0x70] sm:$0xff]
        %v215 = vld [vmem:[%s170 + $0x78] sm:$0xff]
        %v216 = vld [vmem:[%s170 + $0x80] sm:$0xff]
        %v217 = vld [vmem:[%s170 + $0x88] sm:$0xff]
        %v218 = vld [vmem:[%s170 + $0x90] sm:$0xff]
        %v219 = vld [vmem:[%s170 + $0x98] sm:$0xff]
        %v220 = vld [vmem:[%s170 + $0xa0] sm:$0xff]
        %v221 = vld [vmem:[%s170 + $0xa8] sm:$0xff]
        %v222 = vld [vmem:[%s170 + $0xb0] sm:$0xff]
        %v223 = vld [vmem:[%s170 + $0xb8] sm:$0xff]
        %v224 = vld [vmem:[%s170 + $0xc0] sm:$0xff]
        %v225 = vld [vmem:[%s170 + $0xc8] sm:$0xff]
        %v226 = vld [vmem:[%s170 + $0xd0] sm:$0xff]
        %v227 = vld [vmem:[%s170 + $0xd8] sm:$0xff]
        %v228 = vld [vmem:[%s170 + $0xe0] sm:$0xff]
        %v229 = vld [vmem:[%s170 + $0xe8] sm:$0xff]
        %v230 = vld [vmem:[%s170 + $0xf0] sm:$0xff]
        %v231 = vld [vmem:[%s170 + $0xf8] sm:$0xff]
        %v232 = vstv %s197
        %v233 = vmul.f32 %v232, %v200
        %v234 = vmul.f32 %v232, %v201
        %v235 = vmul.f32 %v232, %v202
        %v236 = vmul.f32 %v232, %v203
        %v237 = vmul.f32 %v232, %v204
        %v238 = vmul.f32 %v232, %v205
        %v239 = vmul.f32 %v232, %v206
        %v240 = vmul.f32 %v232, %v207
        %v241 = vmul.f32 %v232, %v208
        %v242 = vmul.f32 %v232, %v209
        %v243 = vmul.f32 %v232, %v210
        %v244 = vmul.f32 %v232, %v211
        %v245 = vmul.f32 %v232, %v212
        %v246 = vmul.f32 %v232, %v213
        %v247 = vmul.f32 %v232, %v214
        %v248 = vmul.f32 %v232, %v215
        %v249 = vmul.f32 %v232, %v216
        %v250 = vmul.f32 %v232, %v217
        %v251 = vmul.f32 %v232, %v218
        %v252 = vmul.f32 %v232, %v219
        %v253 = vmul.f32 %v232, %v220
        %v254 = vmul.f32 %v232, %v221
        %v255 = vmul.f32 %v232, %v222
        %v256 = vmul.f32 %v232, %v223
        %v257 = vmul.f32 %v232, %v224
        %v258 = vmul.f32 %v232, %v225
        %v259 = vmul.f32 %v232, %v226
        %v260 = vmul.f32 %v232, %v227
        %v261 = vmul.f32 %v232, %v228
        %v262 = vmul.f32 %v232, %v229
        %v263 = vmul.f32 %v232, %v230
        %v264 = vmul.f32 %v232, %v231
        %v265 = vstv %s199
        %v266 = vadd.f32 %v233, %v265
        %v267 = vadd.f32 %v234, %v265
        %v268 = vadd.f32 %v235, %v265
        %v269 = vadd.f32 %v236, %v265
        %v270 = vadd.f32 %v237, %v265
        %v271 = vadd.f32 %v238, %v265
        %v272 = vadd.f32 %v239, %v265
        %v273 = vadd.f32 %v240, %v265
        %v274 = vadd.f32 %v241, %v265
        %v275 = vadd.f32 %v242, %v265
        %v276 = vadd.f32 %v243, %v265
        %v277 = vadd.f32 %v244, %v265
        %v278 = vadd.f32 %v245, %v265
        %v279 = vadd.f32 %v246, %v265
        %v280 = vadd.f32 %v247, %v265
        %v281 = vadd.f32 %v248, %v265
        %v282 = vadd.f32 %v249, %v265
        %v283 = vadd.f32 %v250, %v265
        %v284 = vadd.f32 %v251, %v265
        %v285 = vadd.f32 %v252, %v265
        %v286 = vadd.f32 %v253, %v265
        %v287 = vadd.f32 %v254, %v265
        %v288 = vadd.f32 %v255, %v265
        %v289 = vadd.f32 %v256, %v265
        %v290 = vadd.f32 %v257, %v265
        %v291 = vadd.f32 %v258, %v265
        %v292 = vadd.f32 %v259, %v265
        %v293 = vadd.f32 %v260, %v265
        %v294 = vadd.f32 %v261, %v265
        %v295 = vadd.f32 %v262, %v265
        %v296 = vadd.f32 %v263, %v265
        %v297 = vadd.f32 %v264, %v265
        %298 = vst [vmem:[%s193] sm:$0xff] %v266
        %299 = vst [vmem:[%s193 + $0x8] sm:$0xff] %v267
        %300 = vst [vmem:[%s193 + $0x10] sm:$0xff] %v268
        %301 = vst [vmem:[%s193 + $0x18] sm:$0xff] %v269
        %302 = vst [vmem:[%s193 + $0x20] sm:$0xff] %v270
        %303 = vst [vmem:[%s193 + $0x28] sm:$0xff] %v271
        %304 = vst [vmem:[%s193 + $0x30] sm:$0xff] %v272
        %305 = vst [vmem:[%s193 + $0x38] sm:$0xff] %v273
        %306 = vst [vmem:[%s193 + $0x40] sm:$0xff] %v274
        %307 = vst [vmem:[%s193 + $0x48] sm:$0xff] %v275
        %308 = vst [vmem:[%s193 + $0x50] sm:$0xff] %v276
        %309 = vst [vmem:[%s193 + $0x58] sm:$0xff] %v277
        %310 = vst [vmem:[%s193 + $0x60] sm:$0xff] %v278
        %311 = vst [vmem:[%s193 + $0x68] sm:$0xff] %v279
        %312 = vst [vmem:[%s193 + $0x70] sm:$0xff] %v280
        %313 = vst [vmem:[%s193 + $0x78] sm:$0xff] %v281
        %314 = vst [vmem:[%s193 + $0x80] sm:$0xff] %v282
        %315 = vst [vmem:[%s193 + $0x88] sm:$0xff] %v283
        %316 = vst [vmem:[%s193 + $0x90] sm:$0xff] %v284
        %317 = vst [vmem:[%s193 + $0x98] sm:$0xff] %v285
        %318 = vst [vmem:[%s193 + $0xa0] sm:$0xff] %v286
        %319 = vst [vmem:[%s193 + $0xa8] sm:$0xff] %v287
        %320 = vst [vmem:[%s193 + $0xb0] sm:$0xff] %v288
        %321 = vst [vmem:[%s193 + $0xb8] sm:$0xff] %v289
        %322 = vst [vmem:[%s193 + $0xc0] sm:$0xff] %v290
        %323 = vst [vmem:[%s193 + $0xc8] sm:$0xff] %v291
        %324 = vst [vmem:[%s193 + $0xd0] sm:$0xff] %v292
        %325 = vst [vmem:[%s193 + $0xd8] sm:$0xff] %v293
        %326 = vst [vmem:[%s193 + $0xe0] sm:$0xff] %v294
        %327 = vst [vmem:[%s193 + $0xe8] sm:$0xff] %v295
        %328 = vst [vmem:[%s193 + $0xf0] sm:$0xff] %v296
        %329 = vst [vmem:[%s193 + $0xf8] sm:$0xff] %v297
        %s330 = sand.u32 %s98, 1
        %s331 = scalar_lea.sflag [#allocation6], %s330
        %s332 = sand.u32 %s98, 1
        %s333 = smul.addr %s332, 256
        %s334 = scalar_lea.vmem [#allocation7], %s333
        // Predicated region
        $region37: #{tpu_custom_call.1} parent=31 // pred_check
          %p335 = pneg %p108
        $region38: #{tpu_custom_call.1} parent=31 // pred_check_branch
          %337 = sbr.rel (%p335) target = $region40
        $region39: #{tpu_custom_call.1} parent=31 // pred_region
          %s338 = smul.u32 4, %s22
          %340 = vsyncadd %s331, 0
          %s341 = smul.addr %s338, 8
          %s342 = smul.addr %s341, 8
          %s343 = scalar_lea.hbm %s3, %s342
          %s344 = sshll.u32 %s334, 4
          %s345 = int_to_ptr.vmem [resolvable:$true] %s344
          %s346 = sshll.u32 %s343, 4
          %s347 = int_to_ptr.hbm [resolvable:$true] %s346
          %352 = dma.vmem_to_hbm [thread:$0]  %s345, 4096, %s347, %s331, 1024, 1024, 64
        $region40: #{tpu_custom_call.1} parent=31 // pred_fallthru
          _
      $region32: #{tpu_custom_call.1} parent=5 // pred_fallthru
        _
      %p353 = scmp.le.s32.totalorder 2, %s17
      // Predicated region
      $region41: #{tpu_custom_call.1} parent=5 // pred_check
        %p354 = pneg %p353
      $region42: #{tpu_custom_call.1} parent=5 // pred_check_branch
        %356 = sbr.rel (%p354) target = $region44
      $region43: #{tpu_custom_call.1} parent=5 // pred_region
        %s357 = ssub.s32 %s17, 2
        // Predicated region
        $region45: #{tpu_custom_call.1} parent=43 // pred_check
          %p358 = pneg %p114
        $region46: #{tpu_custom_call.1} parent=43 // pred_check_branch
          %360 = sbr.rel (%p358) target = $region48
        $region47: #{tpu_custom_call.1} parent=43 // pred_region
          %s361 = sand.u32 %s99, 1
          %s362 = scalar_lea.sflag [#allocation6], %s361
          %s363 = sand.u32 %s99, 1
          %s364 = smul.addr %s363, 256
          %s365 = scalar_lea.vmem [#allocation7], %s364
          %367 = dma.done %s362, 4096
        $region48: #{tpu_custom_call.1} parent=43 // pred_fallthru
          _
      $region44: #{tpu_custom_call.1} parent=5 // pred_fallthru
        _
    $region6: #{tpu_custom_call.1} parent=1 // loop_footer
      %s21 = sadd.s32 1, %s17
    $region7: #{tpu_custom_call.1} parent=1 // loop_footer_branch
      %16 = sbr.rel target = $region3
    $region8: #{tpu_custom_call.1} parent=1 // loop_exit
      _
    %368 = vsyncpa [#allocation5], 1
    %s369 = scalar_lea.sflag [#allocation5], 1
    %370 = vsyncpa %s369, 1
    %371 = vsyncpa [#allocation6], 1
    %s372 = scalar_lea.sflag [#allocation6], 1
    %373 = vsyncpa %s372, 1

</llo_original>
